<compile_context>
chip_gen: v7x
topology: tpu7x:2x2x1
jax: 0.10.0
libtpu: 0.0.40
codegen_flags: <defaults>
</compile_context>

<pallas_src>
import math

import jax
import jax.numpy as jnp
from jax import lax
from jax.experimental import pallas as pl
from jax.experimental.pallas import tpu as pltpu


def _gelu_exact(x):
    # PyTorch F.gelu default: x * 0.5 * (1 + erf(x / sqrt(2)))  (exact erf form)
    return x * 0.5 * (1.0 + lax.erf(x * (1.0 / math.sqrt(2.0))))


def _round_up(x, m):
    return ((x + m - 1) // m) * m


def _vmem_capacity_bytes():
    """Physical per-core VMEM (v5e/v6e: 128 MiB, v7x: 64 MiB); conservative fallback."""
    try:
        cap = getattr(pltpu.get_tpu_info(), "vmem_capacity_bytes", None)
        if cap:
            return int(cap)
    except Exception:
        pass
    return 64 * 1024 * 1024


def _num_tensorcores():
    """Best-effort TensorCores-per-chip (v7x: 2, v5e/v6e: 1)."""
    try:
        info = pltpu.get_tpu_info()
        for name in ("num_cores", "core_count", "num_tensorcores",
                     "tensorcores_per_chip", "cores_per_chip"):
            v = getattr(info, name, None)
            if isinstance(v, int) and v > 0:
                return v
    except Exception:
        pass
    return 1


def gated_fusion_kernel(hs_ref, ht_ref,
                        wg_ref, bg_ref,
                        w19_ref, b19_ref,
                        w20_ref, b20_ref,
                        out_ref):
    cd = wg_ref.dtype                  # MXU operand dtype (bf16 by default)
    hs = hs_ref[...]                   # (tm, Dp), compute dtype
    ht = ht_ref[...]

    # Fused gate matmul: [hs|ht] @ [W17; W18] with f32 MXU accumulation.
    # Contraction depth 2*Dp halves weight pushes / result pops vs. two dots
    # and removes a full (tm, Dp) f32 add.
    xcat = jnp.concatenate([hs, ht], axis=-1)                        # (tm, 2*Dp)
    x = jnp.dot(xcat, wg_ref[...], preferred_element_type=jnp.float32)
    x = x + bg_ref[...]                                              # bg = b17 + b18

    z = jax.nn.sigmoid(x)                      # f32, EUP path
    h = ht + z * (hs - ht)                     # == z*hs + (1-z)*ht; f32 result

    h1 = jnp.dot(h.astype(cd), w19_ref[...],
                 preferred_element_type=jnp.float32) + b19_ref[...]
    g = _gelu_exact(h1)                        # exact erf GELU (PyTorch parity), f32

    out = jnp.dot(g.astype(cd), w20_ref[...],
                  preferred_element_type=jnp.float32) + b20_ref[...]
    out_ref[...] = out.astype(out_ref.dtype)


def prepare_params(params, *, compute_dtype=jnp.bfloat16):
    """One-time packing: pad weights lane-dense to Dp = round_up(D, 128), cast
    to bf16, fuse the gate weights/biases.  Hoisted out of the per-call path so
    a forward pass does not re-read 4*D^2 f32 from HBM every invocation."""
    D = params["w17"].shape[0]
    Dp = _round_up(D, 128)

    def pad_w(w):
        return jnp.pad(w, ((0, Dp - D), (0, Dp - D))).astype(compute_dtype)

    def pad_b(b):
        return jnp.pad(b, ((0, 0), (0, Dp - D))).astype(jnp.float32)

    wg = jnp.concatenate([pad_w(params["w17"]), pad_w(params["w18"])], axis=0)  # (2*Dp, Dp)
    bg = pad_b(params["b17"]) + pad_b(params["b18"])                             # (1, Dp)
    return {
        "D": D, "Dp": Dp, "compute_dtype": compute_dtype,
        "wg": wg, "bg": bg,
        "w19": pad_w(params["w19"]), "b19": pad_b(params["b19"]),
        "w20": pad_w(params["w20"]), "b20": pad_b(params["b20"]),
    }


def _choose_tm(M, Dp, tm):
    """Row tile: multiple of 8.  Shrink for big Dp (VMEM pressure), and only
    force-split tiny M when there are >= 2 TensorCores (v7x megacore) to feed."""
    tm = max(8, (int(tm) // 8) * 8)
    if Dp >= 1024:
        tm = min(tm, 128)    # halves all f32 intermediates at big D, no MXU penalty
    if M <= tm:
        if _num_tensorcores() >= 2 and M >= 16:
            tm = max(8, _round_up((M + 1) // 2, 8))   # 2 parallel steps for megacore
        else:
            tm = max(8, _round_up(M, 8))              # single step on v5e/v6e
    return tm


def gated_fusion(HS, HT, prepared, *, tm=256):
    """HS, HT: (..., D).  prepared: output of prepare_params()."""
    orig_shape = HS.shape
    orig_dtype = HS.dtype
    D, Dp, cd = prepared["D"], prepared["Dp"], prepared["compute_dtype"]
    assert orig_shape[-1] == D

    hs2 = HS.reshape(-1, D)
    ht2 = HT.reshape(-1, D)
    M = hs2.shape[0]

    tm = _choose_tm(M, Dp, tm)
    grid_m = pl.cdiv(M, tm)
    Mp = grid_m * tm

    def pad_act(a):
        return jnp.pad(a, ((0, Mp - M), (0, Dp - D))).astype(cd)

    hs_p = pad_act(hs2)
    ht_p = pad_act(ht2)
    wg, bg = prepared["wg"], prepared["bg"]
    w19, b19 = prepared["w19"], prepared["b19"]
    w20, b20 = prepared["w20"], prepared["b20"]

    act_bytes = jnp.dtype(cd).itemsize
    out_bytes = jnp.dtype(orig_dtype).itemsize
    vmem_cap = _vmem_capacity_bytes()

    cost = pl.CostEstimate(
        flops=8 * Mp * Dp * Dp,                 # one 2*Dp-deep + two Dp-deep matmuls
        transcendentals=2 * Mp * Dp,            # sigmoid + erf
        bytes_accessed=(2 * Mp * Dp * act_bytes          # hs, ht
                        + 4 * Dp * Dp * act_bytes        # wg(2Dp,Dp) + w19 + w20
                        + 3 * Dp * 4                     # biases
                        + Mp * Dp * out_bytes))          # output

    def build_and_call(single_buffer_weights):
        # Grid-invariant blocks (constant index_map) are DMA'd once and stay
        # resident; single-buffering them reclaims the second pipeline buffer.
        wmode = {"pipeline_mode": pl.Buffered(1)} if single_buffer_weights else {}
        n_wbuf = 1 if single_buffer_weights else 2

        row_spec = pl.BlockSpec((tm, Dp), lambda i: (i, 0))
        wg_spec = pl.BlockSpec((2 * Dp, Dp), lambda i: (0, 0), **wmode)
        w_spec = pl.BlockSpec((Dp, Dp), lambda i: (0, 0), **wmode)
        b_spec = pl.BlockSpec((1, Dp), lambda i: (0, 0), **wmode)

        # VMEM accounting: weights/biases (n_wbuf deep), double-buffered row
        # I/O, plus kernel-internal temporaries (bf16 concat + ~6 f32 tiles).
        need = (4 * Dp * Dp * act_bytes * n_wbuf          # wg + w19 + w20
                + 3 * 8 * Dp * 4 * n_wbuf                 # biases (sublane-padded)
                + 2 * tm * Dp * act_bytes * 2             # hs/ht double-buffered
                + tm * Dp * out_bytes * 2                 # out double-buffered
                + tm * 2 * Dp * act_bytes                 # [hs|ht] concat copy
                + 6 * tm * Dp * 4)                        # x, z, h, h1, g, out_f32
        vmem_limit = int(min(max(int(1.3 * need), 32 * 1024 * 1024),
                             int(0.85 * vmem_cap)))

        return pl.pallas_call(
            gated_fusion_kernel,
            out_shape=jax.ShapeDtypeStruct((Mp, Dp), orig_dtype),
            grid_spec=pltpu.PrefetchScalarGridSpec(
                num_scalar_prefetch=0,
                grid=(grid_m,),
                in_specs=[row_spec, row_spec,
                          wg_spec, b_spec,
                          w_spec, b_spec,
                          w_spec, b_spec],
                out_specs=row_spec,
            ),
            compiler_params=pltpu.CompilerParams(
                dimension_semantics=("parallel",),
                vmem_limit_bytes=vmem_limit),
            cost_estimate=cost,
        )(hs_p, ht_p, wg, bg, w19, b19, w20, b20)

    # TODO(synk): for D >= ~2048 on v7x (64 MiB VMEM), stream wg/w19/w20 over an
    # extra K/N grid axis with an f32 scratch accumulator instead of holding all
    # (Dp, Dp) blocks resident.
    try:
        out = build_and_call(True)
    except Exception:
        # Fallback for environments where Buffered(1) on a grid-invariant block
        # is rejected; identical semantics, default double-buffered weights.
        out = build_and_call(False)

    return out[:M, :D].reshape(orig_shape).astype(orig_dtype)


def init_params(key, D, dtype=jnp.float32):
    """Deterministic init mirroring torch.nn.Linear defaults (uniform +-1/sqrt(D)).
    Weights stored pre-transposed as (in, out); biases as (1, D)."""
    bound = 1.0 / math.sqrt(D)
    keys = jax.random.split(key, 8)
    params = {}
    for i, name in enumerate(("17", "18", "19", "20")):
        w = jax.random.uniform(keys[2 * i], (D, D), dtype, -bound, bound)      # (out, in)
        b = jax.random.uniform(keys[2 * i + 1], (1, D), dtype, -bound, bound)  # (1, out)
        params["w" + name] = w.T   # (in, out) so the kernel does x @ W
        params["b" + name] = b
    return params


def reference(HS, HT, params, compute_dtype=jnp.float32):
    """Plain-JAX reference.  compute_dtype=f32 reproduces the PyTorch fp32 math;
    compute_dtype=bf16 mirrors the kernel's operand precision and blend algebra."""
    cd = compute_dtype
    f32 = jnp.float32
    hs = HS.astype(cd)
    ht = HT.astype(cd)
    w17 = params["w17"].astype(cd); w18 = params["w18"].astype(cd)
    w19 = params["w19"].astype(cd); w20 = params["w20"].astype(cd)
    b17 = params["b17"].astype(f32); b18 = params["b18"].astype(f32)
    b19 = params["b19"].astype(f32); b20 = params["b20"].astype(f32)
    xs = jnp.dot(hs, w17, preferred_element_type=f32) + b17
    xt = jnp.dot(ht, w18, preferred_element_type=f32) + b18
    z = jax.nn.sigmoid(xs + xt)
    if jnp.dtype(cd) == jnp.dtype(f32):
        h = z * hs + (1.0 - z) * ht        # original PyTorch form
    else:
        h = ht + z * (hs - ht)             # mirrors the kernel's blend algebra
    h1 = jnp.dot(h.astype(cd), w19, preferred_element_type=f32) + b19
    g = _gelu_exact(h1)
    return jnp.dot(g.astype(cd), w20, preferred_element_type=f32) + b20


if __name__ == "__main__":
    root_key = jax.random.PRNGKey(0)

    def run_case(B, N, K, d, tm):
        D = K * d
        k1, k2, k3 = jax.random.split(jax.random.fold_in(root_key, D), 3)
        HS = jax.random.normal(k1, (B, N, D), jnp.float32)
        HT = jax.random.normal(k2, (B, N, D), jnp.float32)
        params = init_params(k3, D)
        prepared = prepare_params(params)        # one-time pack (pad + bf16 + fuse)

        out = gated_fusion(HS, HT, prepared, tm=tm)
        out = jax.block_until_ready(out)
        assert out.shape == (B, N, D)

        hs2 = HS.reshape(-1, D)
        ht2 = HT.reshape(-1, D)
        ref_matched = reference(hs2, ht2, params, jnp.bfloat16).reshape(B, N, D)
        ref_f32 = reference(hs2, ht2, params, jnp.float32).reshape(B, N, D)
        # Tight check vs. a reference with identical operand precision / algebra
        # (proves the padding / tiling / fused-gate plumbing is exact).
        assert jnp.allclose(out, ref_matched, atol=5e-3, rtol=5e-3), (
            float(jnp.max(jnp.abs(out - ref_matched))))
        # Loose check vs. full-fp32 (PyTorch-equivalent) math — only bf16
        # operand rounding separates the two.
        assert jnp.allclose(out, ref_f32, atol=1e-1, rtol=1e-1), (
            float(jnp.max(jnp.abs(out - ref_f32))))

    # Spec-sized case: K=4, d=8 -> D=32 (padded lane-dense to 128); batch=2, seq=8.
    run_case(B=2, N=8, K=4, d=8, tm=256)
    # Moderate case exercising the multi-step parallel row grid (M=512, tm=256).
    run_case(B=2, N=256, K=4, d=64, tm=256)

    print("KERNEL_OK")
</pallas_src>

<mosaic_0001>
module attributes {stable_mosaic.version = 11 : i64} {
  func.func @gated_fusion_kernel(%arg0: i32, %arg1: memref<16x128xbf16, #tpu.memory_space<vmem>>, %arg2: memref<16x128xbf16, #tpu.memory_space<vmem>>, %arg3: memref<256x128xbf16, #tpu.memory_space<vmem>>, %arg4: memref<1x128xf32, #tpu.memory_space<vmem>>, %arg5: memref<128x128xbf16, #tpu.memory_space<vmem>>, %arg6: memref<1x128xf32, #tpu.memory_space<vmem>>, %arg7: memref<128x128xbf16, #tpu.memory_space<vmem>>, %arg8: memref<1x128xf32, #tpu.memory_space<vmem>>, %arg9: memref<16x128xf32, #tpu.memory_space<vmem>>) attributes {dimension_semantics = [#tpu.dimension_semantics<parallel>], iteration_bounds = array<i64: 1>, scalar_prefetch = 0 : i64, scratch_operands = 0 : i64, tpu.core_type = #tpu.core_type<tc>, window_params = [{transform_indices = @transform_0, window_bounds = array<i64: 16, 128>}, {transform_indices = @transform_1, window_bounds = array<i64: 16, 128>}, {pipeline_mode = #tpu.pipeline_mode<synchronous>, transform_indices = @transform_2, window_bounds = array<i64: 256, 128>}, {pipeline_mode = #tpu.pipeline_mode<synchronous>, transform_indices = @transform_3, window_bounds = array<i64: 1, 128>}, {pipeline_mode = #tpu.pipeline_mode<synchronous>, transform_indices = @transform_4, window_bounds = array<i64: 128, 128>}, {pipeline_mode = #tpu.pipeline_mode<synchronous>, transform_indices = @transform_5, window_bounds = array<i64: 1, 128>}, {pipeline_mode = #tpu.pipeline_mode<synchronous>, transform_indices = @transform_6, window_bounds = array<i64: 128, 128>}, {pipeline_mode = #tpu.pipeline_mode<synchronous>, transform_indices = @transform_7, window_bounds = array<i64: 1, 128>}, {transform_indices = @transform_8, window_bounds = array<i64: 16, 128>}]} {
    %c0 = arith.constant 0 : index
    %c0_0 = arith.constant 0 : index
    %0 = vector.load %arg1[%c0, %c0_0] : memref<16x128xbf16, #tpu.memory_space<vmem>>, vector<16x128xbf16>
    %c0_1 = arith.constant 0 : index
    %c0_2 = arith.constant 0 : index
    %1 = vector.load %arg2[%c0_1, %c0_2] : memref<16x128xbf16, #tpu.memory_space<vmem>>, vector<16x128xbf16>
    %2 = tpu.concatenate %0, %1 in 1 : vector<16x128xbf16>, vector<16x128xbf16> -> vector<16x256xbf16>
    %c0_3 = arith.constant 0 : index
    %c0_4 = arith.constant 0 : index
    %3 = vector.load %arg3[%c0_3, %c0_4] : memref<256x128xbf16, #tpu.memory_space<vmem>>, vector<256x128xbf16>
    %cst = arith.constant dense<0.000000e+00> : vector<16x128xf32>
    %4 = tpu.matmul %2, %3, %cst {dimension_numbers = #tpu.dot_dimension_numbers<[1], [0], [0], [1], [0, 0, 1, 1], [], []>} : vector<16x256xbf16>, vector<256x128xbf16>, vector<16x128xf32> -> vector<16x128xf32>
    %c0_5 = arith.constant 0 : index
    %c0_6 = arith.constant 0 : index
    %5 = vector.load %arg4[%c0_5, %c0_6] : memref<1x128xf32, #tpu.memory_space<vmem>>, vector<1x128xf32>
    %6 = vector.broadcast %5 : vector<1x128xf32> to vector<16x128xf32>
    %7 = arith.addf %4, %6 : vector<16x128xf32>
    %8 = arith.negf %7 : vector<16x128xf32>
    %9 = math.exp %8 : vector<16x128xf32>
    %cst_7 = arith.constant 1.000000e+00 : f32
    %10 = vector.broadcast %cst_7 : f32 to vector<16x128xf32>
    %11 = arith.addf %10, %9 : vector<16x128xf32>
    %12 = arith.divf %10, %11 : vector<16x128xf32>
    %13 = arith.subf %0, %1 : vector<16x128xbf16>
    %14 = arith.extf %13 : vector<16x128xbf16> to vector<16x128xf32>
    %15 = arith.mulf %12, %14 : vector<16x128xf32>
    %16 = arith.extf %1 : vector<16x128xbf16> to vector<16x128xf32>
    %17 = arith.addf %16, %15 : vector<16x128xf32>
    %18 = arith.truncf %17 : vector<16x128xf32> to vector<16x128xbf16>
    %c0_8 = arith.constant 0 : index
    %c0_9 = arith.constant 0 : index
    %19 = vector.load %arg5[%c0_8, %c0_9] : memref<128x128xbf16, #tpu.memory_space<vmem>>, vector<128x128xbf16>
    %cst_10 = arith.constant dense<0.000000e+00> : vector<16x128xf32>
    %20 = tpu.matmul %18, %19, %cst_10 {dimension_numbers = #tpu.dot_dimension_numbers<[1], [0], [0], [1], [0, 0, 1, 1], [], []>} : vector<16x128xbf16>, vector<128x128xbf16>, vector<16x128xf32> -> vector<16x128xf32>
    %c0_11 = arith.constant 0 : index
    %c0_12 = arith.constant 0 : index
    %21 = vector.load %arg6[%c0_11, %c0_12] : memref<1x128xf32, #tpu.memory_space<vmem>>, vector<1x128xf32>
    %22 = vector.broadcast %21 : vector<1x128xf32> to vector<16x128xf32>
    %23 = arith.addf %20, %22 : vector<16x128xf32>
    %cst_13 = arith.constant 5.000000e-01 : f32
    %24 = vector.broadcast %cst_13 : f32 to vector<16x128xf32>
    %25 = arith.mulf %23, %24 : vector<16x128xf32>
    %cst_14 = arith.constant 0.707106769 : f32
    %26 = vector.broadcast %cst_14 : f32 to vector<16x128xf32>
    %27 = arith.mulf %23, %26 : vector<16x128xf32>
    %28 = math.erf %27 : vector<16x128xf32>
    %cst_15 = arith.constant 1.000000e+00 : f32
    %29 = vector.broadcast %cst_15 : f32 to vector<16x128xf32>
    %30 = arith.addf %29, %28 : vector<16x128xf32>
    %31 = arith.mulf %25, %30 : vector<16x128xf32>
    %32 = arith.truncf %31 : vector<16x128xf32> to vector<16x128xbf16>
    %c0_16 = arith.constant 0 : index
    %c0_17 = arith.constant 0 : index
    %33 = vector.load %arg7[%c0_16, %c0_17] : memref<128x128xbf16, #tpu.memory_space<vmem>>, vector<128x128xbf16>
    %cst_18 = arith.constant dense<0.000000e+00> : vector<16x128xf32>
    %34 = tpu.matmul %32, %33, %cst_18 {dimension_numbers = #tpu.dot_dimension_numbers<[1], [0], [0], [1], [0, 0, 1, 1], [], []>} : vector<16x128xbf16>, vector<128x128xbf16>, vector<16x128xf32> -> vector<16x128xf32>
    %c0_19 = arith.constant 0 : index
    %c0_20 = arith.constant 0 : index
    %35 = vector.load %arg8[%c0_19, %c0_20] : memref<1x128xf32, #tpu.memory_space<vmem>>, vector<1x128xf32>
    %36 = vector.broadcast %35 : vector<1x128xf32> to vector<16x128xf32>
    %37 = arith.addf %34, %36 : vector<16x128xf32>
    %c0_21 = arith.constant 0 : index
    %c0_22 = arith.constant 0 : index
    %38 = vector.load %arg9[%c0_21, %c0_22] : memref<16x128xf32, #tpu.memory_space<vmem>>, vector<16x128xf32>
    tpu.vector_store %arg9[%c0_21, %c0_22], %37 {strides = array<i32>} : memref<16x128xf32, #tpu.memory_space<vmem>>, vector<16x128xf32>,
    return
  }
  func.func @transform_0(%arg0: i32) -> (i32, i32) {
    %c0_i32 = arith.constant 0 : i32
    %c0_i32_0 = arith.constant 0 : i32
    return %arg0, %c0_i32 : i32, i32
  }
  func.func @transform_1(%arg0: i32) -> (i32, i32) {
    %c0_i32 = arith.constant 0 : i32
    %c0_i32_0 = arith.constant 0 : i32
    return %arg0, %c0_i32 : i32, i32
  }
  func.func @transform_2(%arg0: i32) -> (i32, i32) {
    %c0_i32 = arith.constant 0 : i32
    %c0_i32_0 = arith.constant 0 : i32
    %c0_i32_1 = arith.constant 0 : i32
    return %c0_i32, %c0_i32_0 : i32, i32
  }
  func.func @transform_3(%arg0: i32) -> (i32, i32) {
    %c0_i32 = arith.constant 0 : i32
    %c0_i32_0 = arith.constant 0 : i32
    %c0_i32_1 = arith.constant 0 : i32
    return %c0_i32, %c0_i32_0 : i32, i32
  }
  func.func @transform_4(%arg0: i32) -> (i32, i32) {
    %c0_i32 = arith.constant 0 : i32
    %c0_i32_0 = arith.constant 0 : i32
    %c0_i32_1 = arith.constant 0 : i32
    return %c0_i32, %c0_i32_0 : i32, i32
  }
  func.func @transform_5(%arg0: i32) -> (i32, i32) {
    %c0_i32 = arith.constant 0 : i32
    %c0_i32_0 = arith.constant 0 : i32
    %c0_i32_1 = arith.constant 0 : i32
    return %c0_i32, %c0_i32_0 : i32, i32
  }
  func.func @transform_6(%arg0: i32) -> (i32, i32) {
    %c0_i32 = arith.constant 0 : i32
    %c0_i32_0 = arith.constant 0 : i32
    %c0_i32_1 = arith.constant 0 : i32
    return %c0_i32, %c0_i32_0 : i32, i32
  }
  func.func @transform_7(%arg0: i32) -> (i32, i32) {
    %c0_i32 = arith.constant 0 : i32
    %c0_i32_0 = arith.constant 0 : i32
    %c0_i32_1 = arith.constant 0 : i32
    return %c0_i32, %c0_i32_0 : i32, i32
  }
  func.func @transform_8(%arg0: i32) -> (i32, i32) {
    %c0_i32 = arith.constant 0 : i32
    %c0_i32_0 = arith.constant 0 : i32
    return %arg0, %c0_i32 : i32, i32
  }
}

module attributes {stable_mosaic.version = 11 : i64} {
  func.func @gated_fusion_kernel(%arg0: i32, %arg1: memref<16x128xbf16, #tpu.memory_space<vmem>>, %arg2: memref<16x128xbf16, #tpu.memory_space<vmem>>, %arg3: memref<256x128xbf16, #tpu.memory_space<vmem>>, %arg4: memref<1x128xf32, #tpu.memory_space<vmem>>, %arg5: memref<128x128xbf16, #tpu.memory_space<vmem>>, %arg6: memref<1x128xf32, #tpu.memory_space<vmem>>, %arg7: memref<128x128xbf16, #tpu.memory_space<vmem>>, %arg8: memref<1x128xf32, #tpu.memory_space<vmem>>, %arg9: memref<16x128xf32, #tpu.memory_space<vmem>>) attributes {dimension_semantics = [#tpu.dimension_semantics<parallel>], iteration_bounds = array<i64: 1>, scalar_prefetch = 0 : i64, scratch_operands = 0 : i64, tpu.core_type = #tpu.core_type<tc>, window_params = [{transform_indices = @transform_0, window_bounds = array<i64: 16, 128>}, {transform_indices = @transform_1, window_bounds = array<i64: 16, 128>}, {pipeline_mode = #tpu.pipeline_mode<synchronous>, transform_indices = @transform_2, window_bounds = array<i64: 256, 128>}, {pipeline_mode = #tpu.pipeline_mode<synchronous>, transform_indices = @transform_3, window_bounds = array<i64: 1, 128>}, {pipeline_mode = #tpu.pipeline_mode<synchronous>, transform_indices = @transform_4, window_bounds = array<i64: 128, 128>}, {pipeline_mode = #tpu.pipeline_mode<synchronous>, transform_indices = @transform_5, window_bounds = array<i64: 1, 128>}, {pipeline_mode = #tpu.pipeline_mode<synchronous>, transform_indices = @transform_6, window_bounds = array<i64: 128, 128>}, {pipeline_mode = #tpu.pipeline_mode<synchronous>, transform_indices = @transform_7, window_bounds = array<i64: 1, 128>}, {transform_indices = @transform_8, window_bounds = array<i64: 16, 128>}]} {
    %c0 = arith.constant 0 : index
    %c0_0 = arith.constant 0 : index
    %0 = vector.load %arg1[%c0, %c0_0] : memref<16x128xbf16, #tpu.memory_space<vmem>>, vector<16x128xbf16>
    %c0_1 = arith.constant 0 : index
    %c0_2 = arith.constant 0 : index
    %1 = vector.load %arg2[%c0_1, %c0_2] : memref<16x128xbf16, #tpu.memory_space<vmem>>, vector<16x128xbf16>
    %2 = tpu.concatenate %0, %1 in 1 : vector<16x128xbf16>, vector<16x128xbf16> -> vector<16x256xbf16>
    %c0_3 = arith.constant 0 : index
    %c0_4 = arith.constant 0 : index
    %3 = vector.load %arg3[%c0_3, %c0_4] : memref<256x128xbf16, #tpu.memory_space<vmem>>, vector<256x128xbf16>
    %cst = arith.constant dense<0.000000e+00> : vector<16x128xf32>
    %4 = tpu.matmul %2, %3, %cst {dimension_numbers = #tpu.dot_dimension_numbers<[1], [0], [0], [1], [0, 0, 1, 1], [], []>} : vector<16x256xbf16>, vector<256x128xbf16>, vector<16x128xf32> -> vector<16x128xf32>
    %c0_5 = arith.constant 0 : index
    %c0_6 = arith.constant 0 : index
    %5 = vector.load %arg4[%c0_5, %c0_6] : memref<1x128xf32, #tpu.memory_space<vmem>>, vector<1x128xf32>
    %6 = vector.broadcast %5 : vector<1x128xf32> to vector<16x128xf32>
    %7 = arith.addf %4, %6 : vector<16x128xf32>
    %8 = arith.negf %7 : vector<16x128xf32>
    %9 = math.exp %8 : vector<16x128xf32>
    %cst_7 = arith.constant 1.000000e+00 : f32
    %10 = vector.broadcast %cst_7 : f32 to vector<16x128xf32>
    %11 = arith.addf %10, %9 : vector<16x128xf32>
    %12 = arith.divf %10, %11 : vector<16x128xf32>
    %13 = arith.subf %0, %1 : vector<16x128xbf16>
    %14 = arith.extf %13 : vector<16x128xbf16> to vector<16x128xf32>
    %15 = arith.mulf %12, %14 : vector<16x128xf32>
    %16 = arith.extf %1 : vector<16x128xbf16> to vector<16x128xf32>
    %17 = arith.addf %16, %15 : vector<16x128xf32>
    %18 = arith.truncf %17 : vector<16x128xf32> to vector<16x128xbf16>
    %c0_8 = arith.constant 0 : index
    %c0_9 = arith.constant 0 : index
    %19 = vector.load %arg5[%c0_8, %c0_9] : memref<128x128xbf16, #tpu.memory_space<vmem>>, vector<128x128xbf16>
    %cst_10 = arith.constant dense<0.000000e+00> : vector<16x128xf32>
    %20 = tpu.matmul %18, %19, %cst_10 {dimension_numbers = #tpu.dot_dimension_numbers<[1], [0], [0], [1], [0, 0, 1, 1], [], []>} : vector<16x128xbf16>, vector<128x128xbf16>, vector<16x128xf32> -> vector<16x128xf32>
    %c0_11 = arith.constant 0 : index
    %c0_12 = arith.constant 0 : index
    %21 = vector.load %arg6[%c0_11, %c0_12] : memref<1x128xf32, #tpu.memory_space<vmem>>, vector<1x128xf32>
    %22 = vector.broadcast %21 : vector<1x128xf32> to vector<16x128xf32>
    %23 = arith.addf %20, %22 : vector<16x128xf32>
    %cst_13 = arith.constant 5.000000e-01 : f32
    %24 = vector.broadcast %cst_13 : f32 to vector<16x128xf32>
    %25 = arith.mulf %23, %24 : vector<16x128xf32>
    %cst_14 = arith.constant 0.707106769 : f32
    %26 = vector.broadcast %cst_14 : f32 to vector<16x128xf32>
    %27 = arith.mulf %23, %26 : vector<16x128xf32>
    %28 = math.erf %27 : vector<16x128xf32>
    %cst_15 = arith.constant 1.000000e+00 : f32
    %29 = vector.broadcast %cst_15 : f32 to vector<16x128xf32>
    %30 = arith.addf %29, %28 : vector<16x128xf32>
    %31 = arith.mulf %25, %30 : vector<16x128xf32>
    %32 = arith.truncf %31 : vector<16x128xf32> to vector<16x128xbf16>
    %c0_16 = arith.constant 0 : index
    %c0_17 = arith.constant 0 : index
    %33 = vector.load %arg7[%c0_16, %c0_17] : memref<128x128xbf16, #tpu.memory_space<vmem>>, vector<128x128xbf16>
    %cst_18 = arith.constant dense<0.000000e+00> : vector<16x128xf32>
    %34 = tpu.matmul %32, %33, %cst_18 {dimension_numbers = #tpu.dot_dimension_numbers<[1], [0], [0], [1], [0, 0, 1, 1], [], []>} : vector<16x128xbf16>, vector<128x128xbf16>, vector<16x128xf32> -> vector<16x128xf32>
    %c0_19 = arith.constant 0 : index
    %c0_20 = arith.constant 0 : index
    %35 = vector.load %arg8[%c0_19, %c0_20] : memref<1x128xf32, #tpu.memory_space<vmem>>, vector<1x128xf32>
    %36 = vector.broadcast %35 : vector<1x128xf32> to vector<16x128xf32>
    %37 = arith.addf %34, %36 : vector<16x128xf32>
    %c0_21 = arith.constant 0 : index
    %c0_22 = arith.constant 0 : index
    %38 = vector.load %arg9[%c0_21, %c0_22] : memref<16x128xf32, #tpu.memory_space<vmem>>, vector<16x128xf32>
    tpu.vector_store %arg9[%c0_21, %c0_22], %37 {strides = array<i32>} : memref<16x128xf32, #tpu.memory_space<vmem>>, vector<16x128xf32>,
    return
  }
  func.func @transform_0(%arg0: i32) -> (i32, i32) {
    %c0_i32 = arith.constant 0 : i32
    %c0_i32_0 = arith.constant 0 : i32
    return %arg0, %c0_i32 : i32, i32
  }
  func.func @transform_1(%arg0: i32) -> (i32, i32) {
    %c0_i32 = arith.constant 0 : i32
    %c0_i32_0 = arith.constant 0 : i32
    return %arg0, %c0_i32 : i32, i32
  }
  func.func @transform_2(%arg0: i32) -> (i32, i32) {
    %c0_i32 = arith.constant 0 : i32
    %c0_i32_0 = arith.constant 0 : i32
    %c0_i32_1 = arith.constant 0 : i32
    return %c0_i32, %c0_i32_0 : i32, i32
  }
  func.func @transform_3(%arg0: i32) -> (i32, i32) {
    %c0_i32 = arith.constant 0 : i32
    %c0_i32_0 = arith.constant 0 : i32
    %c0_i32_1 = arith.constant 0 : i32
    return %c0_i32, %c0_i32_0 : i32, i32
  }
  func.func @transform_4(%arg0: i32) -> (i32, i32) {
    %c0_i32 = arith.constant 0 : i32
    %c0_i32_0 = arith.constant 0 : i32
    %c0_i32_1 = arith.constant 0 : i32
    return %c0_i32, %c0_i32_0 : i32, i32
  }
  func.func @transform_5(%arg0: i32) -> (i32, i32) {
    %c0_i32 = arith.constant 0 : i32
    %c0_i32_0 = arith.constant 0 : i32
    %c0_i32_1 = arith.constant 0 : i32
    return %c0_i32, %c0_i32_0 : i32, i32
  }
  func.func @transform_6(%arg0: i32) -> (i32, i32) {
    %c0_i32 = arith.constant 0 : i32
    %c0_i32_0 = arith.constant 0 : i32
    %c0_i32_1 = arith.constant 0 : i32
    return %c0_i32, %c0_i32_0 : i32, i32
  }
  func.func @transform_7(%arg0: i32) -> (i32, i32) {
    %c0_i32 = arith.constant 0 : i32
    %c0_i32_0 = arith.constant 0 : i32
    %c0_i32_1 = arith.constant 0 : i32
    return %c0_i32, %c0_i32_0 : i32, i32
  }
  func.func @transform_8(%arg0: i32) -> (i32, i32) {
    %c0_i32 = arith.constant 0 : i32
    %c0_i32_0 = arith.constant 0 : i32
    return %arg0, %c0_i32 : i32, i32
  }
}

</mosaic_0001>

<llo_original>
// kernel: tpu_custom_call.1
$region0: #{tpu_custom_call.1}
  #allocation0 [shape = 'u32[]', space=smem, size = 0x4, offset = 0x4, fixed_abs, tag = 'smem constant byte address 0x4 - core index']
  #allocation1 [shape = 'u32[144,128]{1,0:T(1,128)}', space=vmem, size = 0x12000, scoped, tag = 'internal scratch']
  %s0 = inlined_call_operand.hbm [shape: bf16[16,128], index: 0, kind: input, shape index: {}]
  %s1 = inlined_call_operand.hbm [shape: bf16[16,128], index: 1, kind: input, shape index: {}]
  %s2 = inlined_call_operand.hbm [shape: bf16[256,128], index: 2, kind: input, shape index: {}]
  %s3 = inlined_call_operand.vmem [shape: f32[1,128], index: 3, kind: input, shape index: {}]
  %s4 = inlined_call_operand.hbm [shape: bf16[128,128], index: 4, kind: input, shape index: {}]
  %s5 = inlined_call_operand.vmem [shape: f32[1,128], index: 5, kind: input, shape index: {}]
  %s6 = inlined_call_operand.hbm [shape: bf16[128,128], index: 6, kind: input, shape index: {}]
  %s7 = inlined_call_operand.vmem [shape: f32[1,128], index: 7, kind: input, shape index: {}]
  %s8 = inlined_call_operand.hbm [shape: f32[16,128], index: 8, kind: output, shape index: {}]
  %s9 = sld [smem:[#allocation0]]
  $region62: #{tpu_custom_call.1} parent=0
    _
  %s11 = ssub.s32 1, %s9
  %s12 = scalar_select 0, %s11, %s9
  $region1: #{tpu_custom_call.1} parent=0
    #allocation2 [shape = 'u8[4096]{0}', space=vmem, size = 0x1000, scoped, tag = 'input window, operand 0, single buffered']
    #allocation3 [shape = 's32[1]{0}', space=sflag, size = 0x4, scoped, tag = 'scoped memory for tpu_custom_call.1']
    #allocation4 [shape = 's32[1]{0}', space=sflag, size = 0x4, scoped, tag = 'scoped memory for tpu_custom_call.1']
    #allocation5 [shape = 'u8[4096]{0}', space=vmem, size = 0x1000, scoped, tag = 'input window, operand 1, single buffered']
    #allocation6 [shape = 's32[1]{0}', space=sflag, size = 0x4, scoped, tag = 'scoped memory for tpu_custom_call.1']
    #allocation7 [shape = 'u8[65536]{0}', space=vmem, size = 0x10000, scoped, tag = 'input window, operand 2, single buffered']
    #allocation8 [shape = 'u8[32768]{0}', space=vmem, size = 0x8000, scoped, tag = 'input window, operand 4, single buffered']
    #allocation9 [shape = 's32[1]{0}', space=sflag, size = 0x4, scoped, tag = 'scoped memory for tpu_custom_call.1']
    #allocation10 [shape = 'u8[32768]{0}', space=vmem, size = 0x8000, scoped, tag = 'input window, operand 6, single buffered']
    #allocation11 [shape = 'u8[8192]{0}', space=vmem, size = 0x2000, scoped, tag = 'output window, operand 0, single buffered']
    %13 = vsyncpa [#allocation3], 0
    %14 = vsyncpa [#allocation6], 0
    %15 = vsyncpa [#allocation9], 0
    %16 = vsyncpa [#allocation4], 0
    // Predicated region
    $region2: #{tpu_custom_call.1} parent=1 // pred_check
      _
    $region3: #{tpu_custom_call.1} parent=1 // pred_check_branch
      %18 = sbr.rel (0) target = $region5
    $region4: #{tpu_custom_call.1} parent=1 // pred_region
      %s20 = ssub.s32 128, 128
      %21 = vsyncadd [#allocation3], %s20
      %s22 = sshll.u32 [#allocation2], 4
      %s23 = int_to_ptr.vmem [resolvable:$true] %s22
      %28 = dma.hbm_to_vmem [thread:$0]  %s0, 128, %s23, [#allocation3], 64, 64, 4
    $region5: #{tpu_custom_call.1} parent=1 // pred_fallthru
      _
    // Predicated region
    $region6: #{tpu_custom_call.1} parent=1 // pred_check
      _
    $region7: #{tpu_custom_call.1} parent=1 // pred_check_branch
      %30 = sbr.rel (0) target = $region9
    $region8: #{tpu_custom_call.1} parent=1 // pred_region
      %s32 = ssub.s32 128, 128
      %33 = vsyncadd [#allocation6], %s32
      %s34 = sshll.u32 [#allocation5], 4
      %s35 = int_to_ptr.vmem [resolvable:$true] %s34
      %40 = dma.hbm_to_vmem [thread:$0]  %s1, 128, %s35, [#allocation6], 64, 64, 4
    $region9: #{tpu_custom_call.1} parent=1 // pred_fallthru
      _
    // Predicated region
    $region10: #{tpu_custom_call.1} parent=1 // pred_check
      _
    $region11: #{tpu_custom_call.1} parent=1 // pred_check_branch
      %42 = sbr.rel (0) target = $region13
    $region12: #{tpu_custom_call.1} parent=1 // pred_region
      %s44 = ssub.s32 2048, 2048
      %45 = vsyncadd [#allocation6], %s44
      %s46 = sshll.u32 [#allocation7], 4
      %s47 = int_to_ptr.vmem [resolvable:$true] %s46
      %52 = dma.hbm_to_vmem [thread:$0]  %s2, 2048, %s47, [#allocation6], 64, 64, 4
    $region13: #{tpu_custom_call.1} parent=1 // pred_fallthru
      _
    // Predicated region
    $region14: #{tpu_custom_call.1} parent=1 // pred_check
      _
    $region15: #{tpu_custom_call.1} parent=1 // pred_check_branch
      %54 = sbr.rel (0) target = $region17
    $region16: #{tpu_custom_call.1} parent=1 // pred_region
      _
    $region17: #{tpu_custom_call.1} parent=1 // pred_fallthru
      _
    // Predicated region
    $region18: #{tpu_custom_call.1} parent=1 // pred_check
      _
    $region19: #{tpu_custom_call.1} parent=1 // pred_check_branch
      %56 = sbr.rel (0) target = $region21
    $region20: #{tpu_custom_call.1} parent=1 // pred_region
      %s58 = ssub.s32 1024, 1024
      %59 = vsyncadd [#allocation9], %s58
      %s60 = sshll.u32 [#allocation8], 4
      %s61 = int_to_ptr.vmem [resolvable:$true] %s60
      %66 = dma.hbm_to_vmem [thread:$0]  %s4, 1024, %s61, [#allocation9], 64, 64, 4
    $region21: #{tpu_custom_call.1} parent=1 // pred_fallthru
      _
    // Predicated region
    $region22: #{tpu_custom_call.1} parent=1 // pred_check
      _
    $region23: #{tpu_custom_call.1} parent=1 // pred_check_branch
      %68 = sbr.rel (0) target = $region25
    $region24: #{tpu_custom_call.1} parent=1 // pred_region
      _
    $region25: #{tpu_custom_call.1} parent=1 // pred_fallthru
      _
    // Predicated region
    $region26: #{tpu_custom_call.1} parent=1 // pred_check
      _
    $region27: #{tpu_custom_call.1} parent=1 // pred_check_branch
      %70 = sbr.rel (0) target = $region29
    $region28: #{tpu_custom_call.1} parent=1 // pred_region
      %s72 = ssub.s32 1024, 1024
      %73 = vsyncadd [#allocation9], %s72
      %s74 = sshll.u32 [#allocation10], 4
      %s75 = int_to_ptr.vmem [resolvable:$true] %s74
      %80 = dma.hbm_to_vmem [thread:$0]  %s6, 1024, %s75, [#allocation9], 64, 64, 4
    $region29: #{tpu_custom_call.1} parent=1 // pred_fallthru
      _
    // Predicated region
    $region30: #{tpu_custom_call.1} parent=1 // pred_check
      _
    $region31: #{tpu_custom_call.1} parent=1 // pred_check_branch
      %82 = sbr.rel (0) target = $region33
    $region32: #{tpu_custom_call.1} parent=1 // pred_region
      _
    $region33: #{tpu_custom_call.1} parent=1 // pred_fallthru
      _
    // Predicated region
    $region34: #{tpu_custom_call.1} parent=1 // pred_check
      _
    $region35: #{tpu_custom_call.1} parent=1 // pred_check_branch
      %84 = sbr.rel (0) target = $region37
    $region36: #{tpu_custom_call.1} parent=1 // pred_region
      %85 = dma.done [#allocation3], 128
    $region37: #{tpu_custom_call.1} parent=1 // pred_fallthru
      _
    // Predicated region
    $region38: #{tpu_custom_call.1} parent=1 // pred_check
      _
    $region39: #{tpu_custom_call.1} parent=1 // pred_check_branch
      %87 = sbr.rel (0) target = $region41
    $region40: #{tpu_custom_call.1} parent=1 // pred_region
      %88 = dma.done [#allocation6], 128
    $region41: #{tpu_custom_call.1} parent=1 // pred_fallthru
      _
    // Predicated region
    $region42: #{tpu_custom_call.1} parent=1 // pred_check
      _
    $region43: #{tpu_custom_call.1} parent=1 // pred_check_branch
      %90 = sbr.rel (0) target = $region45
    $region44: #{tpu_custom_call.1} parent=1 // pred_region
      %91 = dma.done [#allocation6], 2048
    $region45: #{tpu_custom_call.1} parent=1 // pred_fallthru
      _
    // Predicated region
    $region46: #{tpu_custom_call.1} parent=1 // pred_check
      _
    $region47: #{tpu_custom_call.1} parent=1 // pred_check_branch
      %93 = sbr.rel (0) target = $region49
    $region48: #{tpu_custom_call.1} parent=1 // pred_region
      %94 = dma.done [#allocation9], 1024
    $region49: #{tpu_custom_call.1} parent=1 // pred_fallthru
      _
    // Predicated region
    $region50: #{tpu_custom_call.1} parent=1 // pred_check
      _
    $region51: #{tpu_custom_call.1} parent=1 // pred_check_branch
      %96 = sbr.rel (0) target = $region53
    $region52: #{tpu_custom_call.1} parent=1 // pred_region
      %97 = dma.done [#allocation9], 1024
    $region53: #{tpu_custom_call.1} parent=1 // pred_fallthru
      _
    %v99 = vld [vmem:[#allocation2] sm:$0xf]
    %v100 = vld [vmem:[#allocation2 + $0x4] sm:$0xf]
    %v101 = vld [vmem:[#allocation5] sm:$0xf]
    %v102 = vld [vmem:[#allocation5 + $0x4] sm:$0xf]
    %v105 = vunpack.c.l.b16 %v99
    %v106 = vunpack.c.l.b16 %v100
    %v107 = vpack.c.b16 %v106, %v105
    %v111 = vunpack.c.l.b16 %v101
    %v112 = vunpack.c.l.b16 %v102
    %v113 = vpack.c.b16 %v112, %v111
    %v115 = vld [vmem:[#allocation7] sm:$0xf]
    %v116 = vld [vmem:[#allocation7 + $0x4] sm:$0xf]
    %v117 = vld [vmem:[#allocation7 + $0x8] sm:$0xf]
    %v118 = vld [vmem:[#allocation7 + $0xc] sm:$0xf]
    %v119 = vld [vmem:[#allocation7 + $0x10] sm:$0xf]
    %v120 = vld [vmem:[#allocation7 + $0x14] sm:$0xf]
    %v121 = vld [vmem:[#allocation7 + $0x18] sm:$0xf]
    %v122 = vld [vmem:[#allocation7 + $0x1c] sm:$0xf]
    %v123 = vld [vmem:[#allocation7 + $0x20] sm:$0xf]
    %v124 = vld [vmem:[#allocation7 + $0x24] sm:$0xf]
    %v125 = vld [vmem:[#allocation7 + $0x28] sm:$0xf]
    %v126 = vld [vmem:[#allocation7 + $0x2c] sm:$0xf]
    %v127 = vld [vmem:[#allocation7 + $0x30] sm:$0xf]
    %v128 = vld [vmem:[#allocation7 + $0x34] sm:$0xf]
    %v129 = vld [vmem:[#allocation7 + $0x38] sm:$0xf]
    %v130 = vld [vmem:[#allocation7 + $0x3c] sm:$0xf]
    %v131 = vld [vmem:[#allocation7 + $0x40] sm:$0xf]
    %v132 = vld [vmem:[#allocation7 + $0x44] sm:$0xf]
    %v133 = vld [vmem:[#allocation7 + $0x48] sm:$0xf]
    %v134 = vld [vmem:[#allocation7 + $0x4c] sm:$0xf]
    %v135 = vld [vmem:[#allocation7 + $0x50] sm:$0xf]
    %v136 = vld [vmem:[#allocation7 + $0x54] sm:$0xf]
    %v137 = vld [vmem:[#allocation7 + $0x58] sm:$0xf]
    %v138 = vld [vmem:[#allocation7 + $0x5c] sm:$0xf]
    %v139 = vld [vmem:[#allocation7 + $0x60] sm:$0xf]
    %v140 = vld [vmem:[#allocation7 + $0x64] sm:$0xf]
    %v141 = vld [vmem:[#allocation7 + $0x68] sm:$0xf]
    %v142 = vld [vmem:[#allocation7 + $0x6c] sm:$0xf]
    %v143 = vld [vmem:[#allocation7 + $0x70] sm:$0xf]
    %v144 = vld [vmem:[#allocation7 + $0x74] sm:$0xf]
    %v145 = vld [vmem:[#allocation7 + $0x78] sm:$0xf]
    %v146 = vld [vmem:[#allocation7 + $0x7c] sm:$0xf]
    %v147 = vld [vmem:[%s3] sm:$0x1]
    %v149 = vlaneseq
    %v150 = vshrl.u32 %v149, 7
    %v151 = vsub.s32 0, %v150
    %v152 = vrot.slane %v147, %v151
    %v186 = vunpack.c.l.b16 %v115
    %v187 = vunpack.c.l.b16 %v116
    %v188 = vunpack.c.l.b16 %v117
    %v189 = vunpack.c.l.b16 %v118
    %v190 = vunpack.c.l.b16 %v119
    %v191 = vunpack.c.l.b16 %v120
    %v192 = vunpack.c.l.b16 %v121
    %v193 = vunpack.c.l.b16 %v122
    %v194 = vunpack.c.l.b16 %v123
    %v195 = vunpack.c.l.b16 %v124
    %v196 = vunpack.c.l.b16 %v125
    %v197 = vunpack.c.l.b16 %v126
    %v198 = vunpack.c.l.b16 %v127
    %v199 = vunpack.c.l.b16 %v128
    %v200 = vunpack.c.l.b16 %v129
    %v201 = vunpack.c.l.b16 %v130
    %v202 = vunpack.c.l.b16 %v131
    %v203 = vunpack.c.l.b16 %v132
    %v204 = vunpack.c.l.b16 %v133
    %v205 = vunpack.c.l.b16 %v134
    %v206 = vunpack.c.l.b16 %v135
    %v207 = vunpack.c.l.b16 %v136
    %v208 = vunpack.c.l.b16 %v137
    %v209 = vunpack.c.l.b16 %v138
    %v210 = vunpack.c.l.b16 %v139
    %v211 = vunpack.c.l.b16 %v140
    %v212 = vunpack.c.l.b16 %v141
    %v213 = vunpack.c.l.b16 %v142
    %v214 = vunpack.c.l.b16 %v143
    %v215 = vunpack.c.l.b16 %v144
    %v216 = vunpack.c.l.b16 %v145
    %v217 = vunpack.c.l.b16 %v146
    %v218 = vpack.c.b16 %v187, %v186
    %v219 = vpack.c.b16 %v189, %v188
    %v220 = vpack.c.b16 %v191, %v190
    %v221 = vpack.c.b16 %v193, %v192
    %v222 = vpack.c.b16 %v195, %v194
    %v223 = vpack.c.b16 %v197, %v196
    %v224 = vpack.c.b16 %v199, %v198
    %v225 = vpack.c.b16 %v201, %v200
    %v226 = vpack.c.b16 %v203, %v202
    %v227 = vpack.c.b16 %v205, %v204
    %v228 = vpack.c.b16 %v207, %v206
    %v229 = vpack.c.b16 %v209, %v208
    %v230 = vpack.c.b16 %v211, %v210
    %v231 = vpack.c.b16 %v213, %v212
    %v232 = vpack.c.b16 %v215, %v214
    %v233 = vpack.c.b16 %v217, %v216
    %250 = vmatprep.subr.bf16.mxu0 0
    %251 = vmatpush1.bf16.msra.mxu0 %v218
    %252 = vmatprep.subr.bf16.mxu0 0
    %253 = vmatpush1.bf16.msra.mxu0 %v219
    %254 = vmatprep.subr.bf16.mxu0 0
    %255 = vmatpush1.bf16.msra.mxu0 %v220
    %256 = vmatprep.subr.bf16.mxu0 0
    %257 = vmatpush1.bf16.msra.mxu0 %v221
    %258 = vmatprep.subr.bf16.mxu0 0
    %259 = vmatpush1.bf16.msra.mxu0 %v222
    %260 = vmatprep.subr.bf16.mxu0 0
    %261 = vmatpush1.bf16.msra.mxu0 %v223
    %262 = vmatprep.subr.bf16.mxu0 0
    %263 = vmatpush1.bf16.msra.mxu0 %v224
    %264 = vmatprep.subr.bf16.mxu0 0
    %265 = vmatpush1.bf16.msra.mxu0 %v225
    %266 = vmatprep.subr.bf16.mxu0 0
    %267 = vmatpush1.bf16.msra.mxu0 %v226
    %268 = vmatprep.subr.bf16.mxu0 0
    %269 = vmatpush1.bf16.msra.mxu0 %v227
    %270 = vmatprep.subr.bf16.mxu0 0
    %271 = vmatpush1.bf16.msra.mxu0 %v228
    %272 = vmatprep.subr.bf16.mxu0 0
    %273 = vmatpush1.bf16.msra.mxu0 %v229
    %274 = vmatprep.subr.bf16.mxu0 0
    %275 = vmatpush1.bf16.msra.mxu0 %v230
    %276 = vmatprep.subr.bf16.mxu0 0
    %277 = vmatpush1.bf16.msra.mxu0 %v231
    %278 = vmatprep.subr.bf16.mxu0 0
    %279 = vmatpush1.bf16.msra.mxu0 %v232
    %280 = vmatprep.subr.bf16.mxu0 0
    %281 = vmatpush1.bf16.msra.mxu0 %v233
    %282 = vmatprep.mubr.bf16.mxu0 %v113
    %283 = vmatmul.mubr.bf16.gmra.mrb[0].mxu0 %v107
    %v284 = vpop.f32.mrb[0].mxu0
    %v285 = vadd.f32 %v152, %v284
    %v286 = vpop.f32.mrb[0].mxu0
    %v287 = vpop.f32.mrb[0].mxu0
    %v288 = vadd.f32 %v152, %v287
    %v289 = vpop.f32.mrb[0].mxu0
    %290 = vdwg.mxu0
    %v291 = vxor.u32 %v285, 2147483648
    %v292 = vxor.u32 %v288, 2147483648
    %v293 = vmul.f32 %v291, 1.442695
    %v294 = vpow.pop %v293
    %v295 = vmul.f32 %v292, 1.442695
    %v296 = vpow.pop %v295
    %v297 = vadd.f32 %v294, 1.0
    %v298 = vadd.f32 %v296, 1.0
    %v299 = vrcp.pop %v297
    %v300 = vmul.f32 1.0, %v299
    %v301 = vrcp.pop %v298
    %v302 = vmul.f32 1.0, %v301
    %v303 = vsub.bf16 %v99, %v101
    %v304 = vsub.bf16 %v100, %v102
    %v305 = vunpack.c.l.bf16 %v303
    %v306 = vunpack.c.l.bf16 %v304
    %v307 = vmul.f32 %v300, %v305
    %v308 = vmul.f32 %v302, %v306
    %v309 = vunpack.c.l.bf16 %v101
    %v310 = vunpack.c.l.bf16 %v102
    %v311 = vadd.f32 %v309, %v307
    %v312 = vadd.f32 %v310, %v308
    %v313 = vpack.c.bf16 %v312, %v311
    %v314 = vld [vmem:[#allocation8] sm:$0xf]
    %v315 = vld [vmem:[#allocation8 + $0x4] sm:$0xf]
    %v316 = vld [vmem:[#allocation8 + $0x8] sm:$0xf]
    %v317 = vld [vmem:[#allocation8 + $0xc] sm:$0xf]
    %v318 = vld [vmem:[#allocation8 + $0x10] sm:$0xf]
    %v319 = vld [vmem:[#allocation8 + $0x14] sm:$0xf]
    %v320 = vld [vmem:[#allocation8 + $0x18] sm:$0xf]
    %v321 = vld [vmem:[#allocation8 + $0x1c] sm:$0xf]
    %v322 = vld [vmem:[#allocation8 + $0x20] sm:$0xf]
    %v323 = vld [vmem:[#allocation8 + $0x24] sm:$0xf]
    %v324 = vld [vmem:[#allocation8 + $0x28] sm:$0xf]
    %v325 = vld [vmem:[#allocation8 + $0x2c] sm:$0xf]
    %v326 = vld [vmem:[#allocation8 + $0x30] sm:$0xf]
    %v327 = vld [vmem:[#allocation8 + $0x34] sm:$0xf]
    %v328 = vld [vmem:[#allocation8 + $0x38] sm:$0xf]
    %v329 = vld [vmem:[#allocation8 + $0x3c] sm:$0xf]
    %v330 = vld [vmem:[%s5] sm:$0x1]
    %v332 = vlaneseq
    %v333 = vshrl.u32 %v332, 7
    %v334 = vsub.s32 0, %v333
    %v335 = vrot.slane %v330, %v334
    %v353 = vunpack.c.l.b16 %v314
    %v354 = vunpack.c.l.b16 %v315
    %v355 = vunpack.c.l.b16 %v316
    %v356 = vunpack.c.l.b16 %v317
    %v357 = vunpack.c.l.b16 %v318
    %v358 = vunpack.c.l.b16 %v319
    %v359 = vunpack.c.l.b16 %v320
    %v360 = vunpack.c.l.b16 %v321
    %v361 = vunpack.c.l.b16 %v322
    %v362 = vunpack.c.l.b16 %v323
    %v363 = vunpack.c.l.b16 %v324
    %v364 = vunpack.c.l.b16 %v325
    %v365 = vunpack.c.l.b16 %v326
    %v366 = vunpack.c.l.b16 %v327
    %v367 = vunpack.c.l.b16 %v328
    %v368 = vunpack.c.l.b16 %v329
    %v369 = vpack.c.b16 %v354, %v353
    %v370 = vpack.c.b16 %v356, %v355
    %v371 = vpack.c.b16 %v358, %v357
    %v372 = vpack.c.b16 %v360, %v359
    %v373 = vpack.c.b16 %v362, %v361
    %v374 = vpack.c.b16 %v364, %v363
    %v375 = vpack.c.b16 %v366, %v365
    %v376 = vpack.c.b16 %v368, %v367
    %385 = vmatprep.subr.bf16.mxu0 0
    %386 = vmatpush1.bf16.msra.mxu0 %v369
    %387 = vmatprep.subr.bf16.mxu0 0
    %388 = vmatpush1.bf16.msra.mxu0 %v370
    %389 = vmatprep.subr.bf16.mxu0 0
    %390 = vmatpush1.bf16.msra.mxu0 %v371
    %391 = vmatprep.subr.bf16.mxu0 0
    %392 = vmatpush1.bf16.msra.mxu0 %v372
    %393 = vmatprep.subr.bf16.mxu0 0
    %394 = vmatpush1.bf16.msra.mxu0 %v373
    %395 = vmatprep.subr.bf16.mxu0 0
    %396 = vmatpush1.bf16.msra.mxu0 %v374
    %397 = vmatprep.subr.bf16.mxu0 0
    %398 = vmatpush1.bf16.msra.mxu0 %v375
    %399 = vmatprep.subr.bf16.mxu0 0
    %400 = vmatpush1.bf16.msra.mxu0 %v376
    %401 = vmatprep.subr.bf16.mxu0 0
    %402 = vmatpush1.bf16.msra.mxu0 0
    %403 = vmatprep.subr.bf16.mxu0 0
    %404 = vmatpush1.bf16.msra.mxu0 0
    %405 = vmatprep.subr.bf16.mxu0 0
    %406 = vmatpush1.bf16.msra.mxu0 0
    %407 = vmatprep.subr.bf16.mxu0 0
    %408 = vmatpush1.bf16.msra.mxu0 0
    %409 = vmatprep.subr.bf16.mxu0 0
    %410 = vmatpush1.bf16.msra.mxu0 0
    %411 = vmatprep.subr.bf16.mxu0 0
    %412 = vmatpush1.bf16.msra.mxu0 0
    %413 = vmatprep.subr.bf16.mxu0 0
    %414 = vmatpush1.bf16.msra.mxu0 0
    %415 = vmatprep.subr.bf16.mxu0 0
    %416 = vmatpush1.bf16.msra.mxu0 0
    %417 = vmatprep.mubr.bf16.mxu0 0
    %418 = vmatmul.mubr.bf16.gmra.mrb[0].mxu0 %v313
    %v419 = vpop.f32.mrb[0].mxu0
    %v420 = vadd.f32 %v335, %v419
    %v421 = vpop.f32.mrb[0].mxu0
    %v422 = vpop.f32.mrb[0].mxu0
    %v423 = vadd.f32 %v335, %v422
    %v424 = vpop.f32.mrb[0].mxu0
    %425 = vdwg.mxu0
    %v426 = vmul.f32 %v420, 0.5
    %v427 = vmul.f32 %v423, 0.5
    %v428 = vmul.f32 %v420, 0.70710677
    %v429 = vmul.f32 %v423, 0.70710677
    %v430 = verf.f32.pop %v428
    %v431 = verf.f32.pop %v429
    %v432 = vadd.f32 %v430, 1.0
    %v433 = vadd.f32 %v431, 1.0
    %v434 = vmul.f32 %v426, %v432
    %v435 = vmul.f32 %v427, %v433
    %v436 = vpack.c.bf16 %v435, %v434
    %v437 = vld [vmem:[#allocation10] sm:$0xf]
    %v438 = vld [vmem:[#allocation10 + $0x4] sm:$0xf]
    %v439 = vld [vmem:[#allocation10 + $0x8] sm:$0xf]
    %v440 = vld [vmem:[#allocation10 + $0xc] sm:$0xf]
    %v441 = vld [vmem:[#allocation10 + $0x10] sm:$0xf]
    %v442 = vld [vmem:[#allocation10 + $0x14] sm:$0xf]
    %v443 = vld [vmem:[#allocation10 + $0x18] sm:$0xf]
    %v444 = vld [vmem:[#allocation10 + $0x1c] sm:$0xf]
    %v445 = vld [vmem:[#allocation10 + $0x20] sm:$0xf]
    %v446 = vld [vmem:[#allocation10 + $0x24] sm:$0xf]
    %v447 = vld [vmem:[#allocation10 + $0x28] sm:$0xf]
    %v448 = vld [vmem:[#allocation10 + $0x2c] sm:$0xf]
    %v449 = vld [vmem:[#allocation10 + $0x30] sm:$0xf]
    %v450 = vld [vmem:[#allocation10 + $0x34] sm:$0xf]
    %v451 = vld [vmem:[#allocation10 + $0x38] sm:$0xf]
    %v452 = vld [vmem:[#allocation10 + $0x3c] sm:$0xf]
    %v453 = vld [vmem:[%s7] sm:$0x1]
    %v455 = vlaneseq
    %v456 = vshrl.u32 %v455, 7
    %v457 = vsub.s32 0, %v456
    %v458 = vrot.slane %v453, %v457
    %v476 = vunpack.c.l.b16 %v437
    %v477 = vunpack.c.l.b16 %v438
    %v478 = vunpack.c.l.b16 %v439
    %v479 = vunpack.c.l.b16 %v440
    %v480 = vunpack.c.l.b16 %v441
    %v481 = vunpack.c.l.b16 %v442
    %v482 = vunpack.c.l.b16 %v443
    %v483 = vunpack.c.l.b16 %v444
    %v484 = vunpack.c.l.b16 %v445
    %v485 = vunpack.c.l.b16 %v446
    %v486 = vunpack.c.l.b16 %v447
    %v487 = vunpack.c.l.b16 %v448
    %v488 = vunpack.c.l.b16 %v449
    %v489 = vunpack.c.l.b16 %v450
    %v490 = vunpack.c.l.b16 %v451
    %v491 = vunpack.c.l.b16 %v452
    %v492 = vpack.c.b16 %v477, %v476
    %v493 = vpack.c.b16 %v479, %v478
    %v494 = vpack.c.b16 %v481, %v480
    %v495 = vpack.c.b16 %v483, %v482
    %v496 = vpack.c.b16 %v485, %v484
    %v497 = vpack.c.b16 %v487, %v486
    %v498 = vpack.c.b16 %v489, %v488
    %v499 = vpack.c.b16 %v491, %v490
    %508 = vmatprep.subr.bf16.mxu0 0
    %509 = vmatpush1.bf16.msra.mxu0 %v492
    %510 = vmatprep.subr.bf16.mxu0 0
    %511 = vmatpush1.bf16.msra.mxu0 %v493
    %512 = vmatprep.subr.bf16.mxu0 0
    %513 = vmatpush1.bf16.msra.mxu0 %v494
    %514 = vmatprep.subr.bf16.mxu0 0
    %515 = vmatpush1.bf16.msra.mxu0 %v495
    %516 = vmatprep.subr.bf16.mxu0 0
    %517 = vmatpush1.bf16.msra.mxu0 %v496
    %518 = vmatprep.subr.bf16.mxu0 0
    %519 = vmatpush1.bf16.msra.mxu0 %v497
    %520 = vmatprep.subr.bf16.mxu0 0
    %521 = vmatpush1.bf16.msra.mxu0 %v498
    %522 = vmatprep.subr.bf16.mxu0 0
    %523 = vmatpush1.bf16.msra.mxu0 %v499
    %524 = vmatprep.subr.bf16.mxu0 0
    %525 = vmatpush1.bf16.msra.mxu0 0
    %526 = vmatprep.subr.bf16.mxu0 0
    %527 = vmatpush1.bf16.msra.mxu0 0
    %528 = vmatprep.subr.bf16.mxu0 0
    %529 = vmatpush1.bf16.msra.mxu0 0
    %530 = vmatprep.subr.bf16.mxu0 0
    %531 = vmatpush1.bf16.msra.mxu0 0
    %532 = vmatprep.subr.bf16.mxu0 0
    %533 = vmatpush1.bf16.msra.mxu0 0
    %534 = vmatprep.subr.bf16.mxu0 0
    %535 = vmatpush1.bf16.msra.mxu0 0
    %536 = vmatprep.subr.bf16.mxu0 0
    %537 = vmatpush1.bf16.msra.mxu0 0
    %538 = vmatprep.subr.bf16.mxu0 0
    %539 = vmatpush1.bf16.msra.mxu0 0
    %540 = vmatprep.mubr.bf16.mxu0 0
    %541 = vmatmul.mubr.bf16.gmra.mrb[0].mxu0 %v436
    %v542 = vpop.f32.mrb[0].mxu0
    %v543 = vadd.f32 %v458, %v542
    %v544 = vpop.f32.mrb[0].mxu0
    %v545 = vpop.f32.mrb[0].mxu0
    %v546 = vadd.f32 %v458, %v545
    %v547 = vpop.f32.mrb[0].mxu0
    %548 = vdwg.mxu0
    %549 = vst [vmem:[#allocation11] sm:$0xff] %v543
    %550 = vst [vmem:[#allocation11 + $0x8] sm:$0xff] %v546
    // Predicated region
    $region54: #{tpu_custom_call.1} parent=1 // pred_check
      _
    $region55: #{tpu_custom_call.1} parent=1 // pred_check_branch
      %552 = sbr.rel (0) target = $region57
    $region56: #{tpu_custom_call.1} parent=1 // pred_region
      %s554 = ssub.s32 256, 256
      %555 = vsyncadd [#allocation4], %s554
      %s556 = sshll.u32 [#allocation11], 4
      %s557 = int_to_ptr.vmem [resolvable:$true] %s556
      %562 = dma.vmem_to_hbm [thread:$0]  %s557, 256, %s8, [#allocation4], 128, 128, 8
    $region57: #{tpu_custom_call.1} parent=1 // pred_fallthru
      _
    // Predicated region
    $region58: #{tpu_custom_call.1} parent=1 // pred_check
      _
    $region59: #{tpu_custom_call.1} parent=1 // pred_check_branch
      %564 = sbr.rel (0) target = $region61
    $region60: #{tpu_custom_call.1} parent=1 // pred_region
      %565 = dma.done [#allocation4], 256
    $region61: #{tpu_custom_call.1} parent=1 // pred_fallthru
      _
    %566 = vsyncpa [#allocation3], 1
    %567 = vsyncpa [#allocation6], 1
    %568 = vsyncpa [#allocation9], 1
    %569 = vsyncpa [#allocation4], 1

// kernel: tpu_custom_call.1
$region0: #{tpu_custom_call.1}
  #allocation0 [shape = 'u32[]', space=smem, size = 0x4, offset = 0x4, fixed_abs, tag = 'smem constant byte address 0x4 - core index']
  #allocation1 [shape = 'u32[144,128]{1,0:T(1,128)}', space=vmem, size = 0x12000, scoped, tag = 'internal scratch']
  %s0 = inlined_call_operand.hbm [shape: bf16[16,128], index: 0, kind: input, shape index: {}]
  %s1 = inlined_call_operand.hbm [shape: bf16[16,128], index: 1, kind: input, shape index: {}]
  %s2 = inlined_call_operand.hbm [shape: bf16[256,128], index: 2, kind: input, shape index: {}]
  %s3 = inlined_call_operand.vmem [shape: f32[1,128], index: 3, kind: input, shape index: {}]
  %s4 = inlined_call_operand.hbm [shape: bf16[128,128], index: 4, kind: input, shape index: {}]
  %s5 = inlined_call_operand.vmem [shape: f32[1,128], index: 5, kind: input, shape index: {}]
  %s6 = inlined_call_operand.hbm [shape: bf16[128,128], index: 6, kind: input, shape index: {}]
  %s7 = inlined_call_operand.vmem [shape: f32[1,128], index: 7, kind: input, shape index: {}]
  %s8 = inlined_call_operand.hbm [shape: f32[16,128], index: 8, kind: output, shape index: {}]
  %s9 = sld [smem:[#allocation0]]
  $region62: #{tpu_custom_call.1} parent=0
    _
  %s11 = ssub.s32 1, %s9
  %s12 = scalar_select 0, %s11, %s9
  $region1: #{tpu_custom_call.1} parent=0
    #allocation2 [shape = 'u8[4096]{0}', space=vmem, size = 0x1000, scoped, tag = 'input window, operand 0, single buffered']
    #allocation3 [shape = 's32[1]{0}', space=sflag, size = 0x4, scoped, tag = 'scoped memory for tpu_custom_call.1']
    #allocation4 [shape = 's32[1]{0}', space=sflag, size = 0x4, scoped, tag = 'scoped memory for tpu_custom_call.1']
    #allocation5 [shape = 'u8[4096]{0}', space=vmem, size = 0x1000, scoped, tag = 'input window, operand 1, single buffered']
    #allocation6 [shape = 's32[1]{0}', space=sflag, size = 0x4, scoped, tag = 'scoped memory for tpu_custom_call.1']
    #allocation7 [shape = 'u8[65536]{0}', space=vmem, size = 0x10000, scoped, tag = 'input window, operand 2, single buffered']
    #allocation8 [shape = 'u8[32768]{0}', space=vmem, size = 0x8000, scoped, tag = 'input window, operand 4, single buffered']
    #allocation9 [shape = 's32[1]{0}', space=sflag, size = 0x4, scoped, tag = 'scoped memory for tpu_custom_call.1']
    #allocation10 [shape = 'u8[32768]{0}', space=vmem, size = 0x8000, scoped, tag = 'input window, operand 6, single buffered']
    #allocation11 [shape = 'u8[8192]{0}', space=vmem, size = 0x2000, scoped, tag = 'output window, operand 0, single buffered']
    %13 = vsyncpa [#allocation3], 0
    %14 = vsyncpa [#allocation6], 0
    %15 = vsyncpa [#allocation9], 0
    %16 = vsyncpa [#allocation4], 0
    // Predicated region
    $region2: #{tpu_custom_call.1} parent=1 // pred_check
      _
    $region3: #{tpu_custom_call.1} parent=1 // pred_check_branch
      %18 = sbr.rel (0) target = $region5
    $region4: #{tpu_custom_call.1} parent=1 // pred_region
      %s20 = ssub.s32 128, 128
      %21 = vsyncadd [#allocation3], %s20
      %s22 = sshll.u32 [#allocation2], 4
      %s23 = int_to_ptr.vmem [resolvable:$true] %s22
      %28 = dma.hbm_to_vmem [thread:$0]  %s0, 128, %s23, [#allocation3], 64, 64, 4
    $region5: #{tpu_custom_call.1} parent=1 // pred_fallthru
      _
    // Predicated region
    $region6: #{tpu_custom_call.1} parent=1 // pred_check
      _
    $region7: #{tpu_custom_call.1} parent=1 // pred_check_branch
      %30 = sbr.rel (0) target = $region9
    $region8: #{tpu_custom_call.1} parent=1 // pred_region
      %s32 = ssub.s32 128, 128
      %33 = vsyncadd [#allocation6], %s32
      %s34 = sshll.u32 [#allocation5], 4
      %s35 = int_to_ptr.vmem [resolvable:$true] %s34
      %40 = dma.hbm_to_vmem [thread:$0]  %s1, 128, %s35, [#allocation6], 64, 64, 4
    $region9: #{tpu_custom_call.1} parent=1 // pred_fallthru
      _
    // Predicated region
    $region10: #{tpu_custom_call.1} parent=1 // pred_check
      _
    $region11: #{tpu_custom_call.1} parent=1 // pred_check_branch
      %42 = sbr.rel (0) target = $region13
    $region12: #{tpu_custom_call.1} parent=1 // pred_region
      %s44 = ssub.s32 2048, 2048
      %45 = vsyncadd [#allocation6], %s44
      %s46 = sshll.u32 [#allocation7], 4
      %s47 = int_to_ptr.vmem [resolvable:$true] %s46
      %52 = dma.hbm_to_vmem [thread:$0]  %s2, 2048, %s47, [#allocation6], 64, 64, 4
    $region13: #{tpu_custom_call.1} parent=1 // pred_fallthru
      _
    // Predicated region
    $region14: #{tpu_custom_call.1} parent=1 // pred_check
      _
    $region15: #{tpu_custom_call.1} parent=1 // pred_check_branch
      %54 = sbr.rel (0) target = $region17
    $region16: #{tpu_custom_call.1} parent=1 // pred_region
      _
    $region17: #{tpu_custom_call.1} parent=1 // pred_fallthru
      _
    // Predicated region
    $region18: #{tpu_custom_call.1} parent=1 // pred_check
      _
    $region19: #{tpu_custom_call.1} parent=1 // pred_check_branch
      %56 = sbr.rel (0) target = $region21
    $region20: #{tpu_custom_call.1} parent=1 // pred_region
      %s58 = ssub.s32 1024, 1024
      %59 = vsyncadd [#allocation9], %s58
      %s60 = sshll.u32 [#allocation8], 4
      %s61 = int_to_ptr.vmem [resolvable:$true] %s60
      %66 = dma.hbm_to_vmem [thread:$0]  %s4, 1024, %s61, [#allocation9], 64, 64, 4
    $region21: #{tpu_custom_call.1} parent=1 // pred_fallthru
      _
    // Predicated region
    $region22: #{tpu_custom_call.1} parent=1 // pred_check
      _
    $region23: #{tpu_custom_call.1} parent=1 // pred_check_branch
      %68 = sbr.rel (0) target = $region25
    $region24: #{tpu_custom_call.1} parent=1 // pred_region
      _
    $region25: #{tpu_custom_call.1} parent=1 // pred_fallthru
      _
    // Predicated region
    $region26: #{tpu_custom_call.1} parent=1 // pred_check
      _
    $region27: #{tpu_custom_call.1} parent=1 // pred_check_branch
      %70 = sbr.rel (0) target = $region29
    $region28: #{tpu_custom_call.1} parent=1 // pred_region
      %s72 = ssub.s32 1024, 1024
      %73 = vsyncadd [#allocation9], %s72
      %s74 = sshll.u32 [#allocation10], 4
      %s75 = int_to_ptr.vmem [resolvable:$true] %s74
      %80 = dma.hbm_to_vmem [thread:$0]  %s6, 1024, %s75, [#allocation9], 64, 64, 4
    $region29: #{tpu_custom_call.1} parent=1 // pred_fallthru
      _
    // Predicated region
    $region30: #{tpu_custom_call.1} parent=1 // pred_check
      _
    $region31: #{tpu_custom_call.1} parent=1 // pred_check_branch
      %82 = sbr.rel (0) target = $region33
    $region32: #{tpu_custom_call.1} parent=1 // pred_region
      _
    $region33: #{tpu_custom_call.1} parent=1 // pred_fallthru
      _
    // Predicated region
    $region34: #{tpu_custom_call.1} parent=1 // pred_check
      _
    $region35: #{tpu_custom_call.1} parent=1 // pred_check_branch
      %84 = sbr.rel (0) target = $region37
    $region36: #{tpu_custom_call.1} parent=1 // pred_region
      %85 = dma.done [#allocation3], 128
    $region37: #{tpu_custom_call.1} parent=1 // pred_fallthru
      _
    // Predicated region
    $region38: #{tpu_custom_call.1} parent=1 // pred_check
      _
    $region39: #{tpu_custom_call.1} parent=1 // pred_check_branch
      %87 = sbr.rel (0) target = $region41
    $region40: #{tpu_custom_call.1} parent=1 // pred_region
      %88 = dma.done [#allocation6], 128
    $region41: #{tpu_custom_call.1} parent=1 // pred_fallthru
      _
    // Predicated region
    $region42: #{tpu_custom_call.1} parent=1 // pred_check
      _
    $region43: #{tpu_custom_call.1} parent=1 // pred_check_branch
      %90 = sbr.rel (0) target = $region45
    $region44: #{tpu_custom_call.1} parent=1 // pred_region
      %91 = dma.done [#allocation6], 2048
    $region45: #{tpu_custom_call.1} parent=1 // pred_fallthru
      _
    // Predicated region
    $region46: #{tpu_custom_call.1} parent=1 // pred_check
      _
    $region47: #{tpu_custom_call.1} parent=1 // pred_check_branch
      %93 = sbr.rel (0) target = $region49
    $region48: #{tpu_custom_call.1} parent=1 // pred_region
      %94 = dma.done [#allocation9], 1024
    $region49: #{tpu_custom_call.1} parent=1 // pred_fallthru
      _
    // Predicated region
    $region50: #{tpu_custom_call.1} parent=1 // pred_check
      _
    $region51: #{tpu_custom_call.1} parent=1 // pred_check_branch
      %96 = sbr.rel (0) target = $region53
    $region52: #{tpu_custom_call.1} parent=1 // pred_region
      %97 = dma.done [#allocation9], 1024
    $region53: #{tpu_custom_call.1} parent=1 // pred_fallthru
      _
    %v99 = vld [vmem:[#allocation2] sm:$0xf]
    %v100 = vld [vmem:[#allocation2 + $0x4] sm:$0xf]
    %v101 = vld [vmem:[#allocation5] sm:$0xf]
    %v102 = vld [vmem:[#allocation5 + $0x4] sm:$0xf]
    %v105 = vunpack.c.l.b16 %v99
    %v106 = vunpack.c.l.b16 %v100
    %v107 = vpack.c.b16 %v106, %v105
    %v111 = vunpack.c.l.b16 %v101
    %v112 = vunpack.c.l.b16 %v102
    %v113 = vpack.c.b16 %v112, %v111
    %v115 = vld [vmem:[#allocation7] sm:$0xf]
    %v116 = vld [vmem:[#allocation7 + $0x4] sm:$0xf]
    %v117 = vld [vmem:[#allocation7 + $0x8] sm:$0xf]
    %v118 = vld [vmem:[#allocation7 + $0xc] sm:$0xf]
    %v119 = vld [vmem:[#allocation7 + $0x10] sm:$0xf]
    %v120 = vld [vmem:[#allocation7 + $0x14] sm:$0xf]
    %v121 = vld [vmem:[#allocation7 + $0x18] sm:$0xf]
    %v122 = vld [vmem:[#allocation7 + $0x1c] sm:$0xf]
    %v123 = vld [vmem:[#allocation7 + $0x20] sm:$0xf]
    %v124 = vld [vmem:[#allocation7 + $0x24] sm:$0xf]
    %v125 = vld [vmem:[#allocation7 + $0x28] sm:$0xf]
    %v126 = vld [vmem:[#allocation7 + $0x2c] sm:$0xf]
    %v127 = vld [vmem:[#allocation7 + $0x30] sm:$0xf]
    %v128 = vld [vmem:[#allocation7 + $0x34] sm:$0xf]
    %v129 = vld [vmem:[#allocation7 + $0x38] sm:$0xf]
    %v130 = vld [vmem:[#allocation7 + $0x3c] sm:$0xf]
    %v131 = vld [vmem:[#allocation7 + $0x40] sm:$0xf]
    %v132 = vld [vmem:[#allocation7 + $0x44] sm:$0xf]
    %v133 = vld [vmem:[#allocation7 + $0x48] sm:$0xf]
    %v134 = vld [vmem:[#allocation7 + $0x4c] sm:$0xf]
    %v135 = vld [vmem:[#allocation7 + $0x50] sm:$0xf]
    %v136 = vld [vmem:[#allocation7 + $0x54] sm:$0xf]
    %v137 = vld [vmem:[#allocation7 + $0x58] sm:$0xf]
    %v138 = vld [vmem:[#allocation7 + $0x5c] sm:$0xf]
    %v139 = vld [vmem:[#allocation7 + $0x60] sm:$0xf]
    %v140 = vld [vmem:[#allocation7 + $0x64] sm:$0xf]
    %v141 = vld [vmem:[#allocation7 + $0x68] sm:$0xf]
    %v142 = vld [vmem:[#allocation7 + $0x6c] sm:$0xf]
    %v143 = vld [vmem:[#allocation7 + $0x70] sm:$0xf]
    %v144 = vld [vmem:[#allocation7 + $0x74] sm:$0xf]
    %v145 = vld [vmem:[#allocation7 + $0x78] sm:$0xf]
    %v146 = vld [vmem:[#allocation7 + $0x7c] sm:$0xf]
    %v147 = vld [vmem:[%s3] sm:$0x1]
    %v149 = vlaneseq
    %v150 = vshrl.u32 %v149, 7
    %v151 = vsub.s32 0, %v150
    %v152 = vrot.slane %v147, %v151
    %v186 = vunpack.c.l.b16 %v115
    %v187 = vunpack.c.l.b16 %v116
    %v188 = vunpack.c.l.b16 %v117
    %v189 = vunpack.c.l.b16 %v118
    %v190 = vunpack.c.l.b16 %v119
    %v191 = vunpack.c.l.b16 %v120
    %v192 = vunpack.c.l.b16 %v121
    %v193 = vunpack.c.l.b16 %v122
    %v194 = vunpack.c.l.b16 %v123
    %v195 = vunpack.c.l.b16 %v124
    %v196 = vunpack.c.l.b16 %v125
    %v197 = vunpack.c.l.b16 %v126
    %v198 = vunpack.c.l.b16 %v127
    %v199 = vunpack.c.l.b16 %v128
    %v200 = vunpack.c.l.b16 %v129
    %v201 = vunpack.c.l.b16 %v130
    %v202 = vunpack.c.l.b16 %v131
    %v203 = vunpack.c.l.b16 %v132
    %v204 = vunpack.c.l.b16 %v133
    %v205 = vunpack.c.l.b16 %v134
    %v206 = vunpack.c.l.b16 %v135
    %v207 = vunpack.c.l.b16 %v136
    %v208 = vunpack.c.l.b16 %v137
    %v209 = vunpack.c.l.b16 %v138
    %v210 = vunpack.c.l.b16 %v139
    %v211 = vunpack.c.l.b16 %v140
    %v212 = vunpack.c.l.b16 %v141
    %v213 = vunpack.c.l.b16 %v142
    %v214 = vunpack.c.l.b16 %v143
    %v215 = vunpack.c.l.b16 %v144
    %v216 = vunpack.c.l.b16 %v145
    %v217 = vunpack.c.l.b16 %v146
    %v218 = vpack.c.b16 %v187, %v186
    %v219 = vpack.c.b16 %v189, %v188
    %v220 = vpack.c.b16 %v191, %v190
    %v221 = vpack.c.b16 %v193, %v192
    %v222 = vpack.c.b16 %v195, %v194
    %v223 = vpack.c.b16 %v197, %v196
    %v224 = vpack.c.b16 %v199, %v198
    %v225 = vpack.c.b16 %v201, %v200
    %v226 = vpack.c.b16 %v203, %v202
    %v227 = vpack.c.b16 %v205, %v204
    %v228 = vpack.c.b16 %v207, %v206
    %v229 = vpack.c.b16 %v209, %v208
    %v230 = vpack.c.b16 %v211, %v210
    %v231 = vpack.c.b16 %v213, %v212
    %v232 = vpack.c.b16 %v215, %v214
    %v233 = vpack.c.b16 %v217, %v216
    %250 = vmatprep.subr.bf16.mxu0 0
    %251 = vmatpush1.bf16.msra.mxu0 %v218
    %252 = vmatprep.subr.bf16.mxu0 0
    %253 = vmatpush1.bf16.msra.mxu0 %v219
    %254 = vmatprep.subr.bf16.mxu0 0
    %255 = vmatpush1.bf16.msra.mxu0 %v220
    %256 = vmatprep.subr.bf16.mxu0 0
    %257 = vmatpush1.bf16.msra.mxu0 %v221
    %258 = vmatprep.subr.bf16.mxu0 0
    %259 = vmatpush1.bf16.msra.mxu0 %v222
    %260 = vmatprep.subr.bf16.mxu0 0
    %261 = vmatpush1.bf16.msra.mxu0 %v223
    %262 = vmatprep.subr.bf16.mxu0 0
    %263 = vmatpush1.bf16.msra.mxu0 %v224
    %264 = vmatprep.subr.bf16.mxu0 0
    %265 = vmatpush1.bf16.msra.mxu0 %v225
    %266 = vmatprep.subr.bf16.mxu0 0
    %267 = vmatpush1.bf16.msra.mxu0 %v226
    %268 = vmatprep.subr.bf16.mxu0 0
    %269 = vmatpush1.bf16.msra.mxu0 %v227
    %270 = vmatprep.subr.bf16.mxu0 0
    %271 = vmatpush1.bf16.msra.mxu0 %v228
    %272 = vmatprep.subr.bf16.mxu0 0
    %273 = vmatpush1.bf16.msra.mxu0 %v229
    %274 = vmatprep.subr.bf16.mxu0 0
    %275 = vmatpush1.bf16.msra.mxu0 %v230
    %276 = vmatprep.subr.bf16.mxu0 0
    %277 = vmatpush1.bf16.msra.mxu0 %v231
    %278 = vmatprep.subr.bf16.mxu0 0
    %279 = vmatpush1.bf16.msra.mxu0 %v232
    %280 = vmatprep.subr.bf16.mxu0 0
    %281 = vmatpush1.bf16.msra.mxu0 %v233
    %282 = vmatprep.mubr.bf16.mxu0 %v113
    %283 = vmatmul.mubr.bf16.gmra.mrb[0].mxu0 %v107
    %v284 = vpop.f32.mrb[0].mxu0
    %v285 = vadd.f32 %v152, %v284
    %v286 = vpop.f32.mrb[0].mxu0
    %v287 = vpop.f32.mrb[0].mxu0
    %v288 = vadd.f32 %v152, %v287
    %v289 = vpop.f32.mrb[0].mxu0
    %290 = vdwg.mxu0
    %v291 = vxor.u32 %v285, 2147483648
    %v292 = vxor.u32 %v288, 2147483648
    %v293 = vmul.f32 %v291, 1.442695
    %v294 = vpow.pop %v293
    %v295 = vmul.f32 %v292, 1.442695
    %v296 = vpow.pop %v295
    %v297 = vadd.f32 %v294, 1.0
    %v298 = vadd.f32 %v296, 1.0
    %v299 = vrcp.pop %v297
    %v300 = vmul.f32 1.0, %v299
    %v301 = vrcp.pop %v298
    %v302 = vmul.f32 1.0, %v301
    %v303 = vsub.bf16 %v99, %v101
    %v304 = vsub.bf16 %v100, %v102
    %v305 = vunpack.c.l.bf16 %v303
    %v306 = vunpack.c.l.bf16 %v304
    %v307 = vmul.f32 %v300, %v305
    %v308 = vmul.f32 %v302, %v306
    %v309 = vunpack.c.l.bf16 %v101
    %v310 = vunpack.c.l.bf16 %v102
    %v311 = vadd.f32 %v309, %v307
    %v312 = vadd.f32 %v310, %v308
    %v313 = vpack.c.bf16 %v312, %v311
    %v314 = vld [vmem:[#allocation8] sm:$0xf]
    %v315 = vld [vmem:[#allocation8 + $0x4] sm:$0xf]
    %v316 = vld [vmem:[#allocation8 + $0x8] sm:$0xf]
    %v317 = vld [vmem:[#allocation8 + $0xc] sm:$0xf]
    %v318 = vld [vmem:[#allocation8 + $0x10] sm:$0xf]
    %v319 = vld [vmem:[#allocation8 + $0x14] sm:$0xf]
    %v320 = vld [vmem:[#allocation8 + $0x18] sm:$0xf]
    %v321 = vld [vmem:[#allocation8 + $0x1c] sm:$0xf]
    %v322 = vld [vmem:[#allocation8 + $0x20] sm:$0xf]
    %v323 = vld [vmem:[#allocation8 + $0x24] sm:$0xf]
    %v324 = vld [vmem:[#allocation8 + $0x28] sm:$0xf]
    %v325 = vld [vmem:[#allocation8 + $0x2c] sm:$0xf]
    %v326 = vld [vmem:[#allocation8 + $0x30] sm:$0xf]
    %v327 = vld [vmem:[#allocation8 + $0x34] sm:$0xf]
    %v328 = vld [vmem:[#allocation8 + $0x38] sm:$0xf]
    %v329 = vld [vmem:[#allocation8 + $0x3c] sm:$0xf]
    %v330 = vld [vmem:[%s5] sm:$0x1]
    %v332 = vlaneseq
    %v333 = vshrl.u32 %v332, 7
    %v334 = vsub.s32 0, %v333
    %v335 = vrot.slane %v330, %v334
    %v353 = vunpack.c.l.b16 %v314
    %v354 = vunpack.c.l.b16 %v315
    %v355 = vunpack.c.l.b16 %v316
    %v356 = vunpack.c.l.b16 %v317
    %v357 = vunpack.c.l.b16 %v318
    %v358 = vunpack.c.l.b16 %v319
    %v359 = vunpack.c.l.b16 %v320
    %v360 = vunpack.c.l.b16 %v321
    %v361 = vunpack.c.l.b16 %v322
    %v362 = vunpack.c.l.b16 %v323
    %v363 = vunpack.c.l.b16 %v324
    %v364 = vunpack.c.l.b16 %v325
    %v365 = vunpack.c.l.b16 %v326
    %v366 = vunpack.c.l.b16 %v327
    %v367 = vunpack.c.l.b16 %v328
    %v368 = vunpack.c.l.b16 %v329
    %v369 = vpack.c.b16 %v354, %v353
    %v370 = vpack.c.b16 %v356, %v355
    %v371 = vpack.c.b16 %v358, %v357
    %v372 = vpack.c.b16 %v360, %v359
    %v373 = vpack.c.b16 %v362, %v361
    %v374 = vpack.c.b16 %v364, %v363
    %v375 = vpack.c.b16 %v366, %v365
    %v376 = vpack.c.b16 %v368, %v367
    %385 = vmatprep.subr.bf16.mxu0 0
    %386 = vmatpush1.bf16.msra.mxu0 %v369
    %387 = vmatprep.subr.bf16.mxu0 0
    %388 = vmatpush1.bf16.msra.mxu0 %v370
    %389 = vmatprep.subr.bf16.mxu0 0
    %390 = vmatpush1.bf16.msra.mxu0 %v371
    %391 = vmatprep.subr.bf16.mxu0 0
    %392 = vmatpush1.bf16.msra.mxu0 %v372
    %393 = vmatprep.subr.bf16.mxu0 0
    %394 = vmatpush1.bf16.msra.mxu0 %v373
    %395 = vmatprep.subr.bf16.mxu0 0
    %396 = vmatpush1.bf16.msra.mxu0 %v374
    %397 = vmatprep.subr.bf16.mxu0 0
    %398 = vmatpush1.bf16.msra.mxu0 %v375
    %399 = vmatprep.subr.bf16.mxu0 0
    %400 = vmatpush1.bf16.msra.mxu0 %v376
    %401 = vmatprep.subr.bf16.mxu0 0
    %402 = vmatpush1.bf16.msra.mxu0 0
    %403 = vmatprep.subr.bf16.mxu0 0
    %404 = vmatpush1.bf16.msra.mxu0 0
    %405 = vmatprep.subr.bf16.mxu0 0
    %406 = vmatpush1.bf16.msra.mxu0 0
    %407 = vmatprep.subr.bf16.mxu0 0
    %408 = vmatpush1.bf16.msra.mxu0 0
    %409 = vmatprep.subr.bf16.mxu0 0
    %410 = vmatpush1.bf16.msra.mxu0 0
    %411 = vmatprep.subr.bf16.mxu0 0
    %412 = vmatpush1.bf16.msra.mxu0 0
    %413 = vmatprep.subr.bf16.mxu0 0
    %414 = vmatpush1.bf16.msra.mxu0 0
    %415 = vmatprep.subr.bf16.mxu0 0
    %416 = vmatpush1.bf16.msra.mxu0 0
    %417 = vmatprep.mubr.bf16.mxu0 0
    %418 = vmatmul.mubr.bf16.gmra.mrb[0].mxu0 %v313
    %v419 = vpop.f32.mrb[0].mxu0
    %v420 = vadd.f32 %v335, %v419
    %v421 = vpop.f32.mrb[0].mxu0
    %v422 = vpop.f32.mrb[0].mxu0
    %v423 = vadd.f32 %v335, %v422
    %v424 = vpop.f32.mrb[0].mxu0
    %425 = vdwg.mxu0
    %v426 = vmul.f32 %v420, 0.5
    %v427 = vmul.f32 %v423, 0.5
    %v428 = vmul.f32 %v420, 0.70710677
    %v429 = vmul.f32 %v423, 0.70710677
    %v430 = verf.f32.pop %v428
    %v431 = verf.f32.pop %v429
    %v432 = vadd.f32 %v430, 1.0
    %v433 = vadd.f32 %v431, 1.0
    %v434 = vmul.f32 %v426, %v432
    %v435 = vmul.f32 %v427, %v433
    %v436 = vpack.c.bf16 %v435, %v434
    %v437 = vld [vmem:[#allocation10] sm:$0xf]
    %v438 = vld [vmem:[#allocation10 + $0x4] sm:$0xf]
    %v439 = vld [vmem:[#allocation10 + $0x8] sm:$0xf]
    %v440 = vld [vmem:[#allocation10 + $0xc] sm:$0xf]
    %v441 = vld [vmem:[#allocation10 + $0x10] sm:$0xf]
    %v442 = vld [vmem:[#allocation10 + $0x14] sm:$0xf]
    %v443 = vld [vmem:[#allocation10 + $0x18] sm:$0xf]
    %v444 = vld [vmem:[#allocation10 + $0x1c] sm:$0xf]
    %v445 = vld [vmem:[#allocation10 + $0x20] sm:$0xf]
    %v446 = vld [vmem:[#allocation10 + $0x24] sm:$0xf]
    %v447 = vld [vmem:[#allocation10 + $0x28] sm:$0xf]
    %v448 = vld [vmem:[#allocation10 + $0x2c] sm:$0xf]
    %v449 = vld [vmem:[#allocation10 + $0x30] sm:$0xf]
    %v450 = vld [vmem:[#allocation10 + $0x34] sm:$0xf]
    %v451 = vld [vmem:[#allocation10 + $0x38] sm:$0xf]
    %v452 = vld [vmem:[#allocation10 + $0x3c] sm:$0xf]
    %v453 = vld [vmem:[%s7] sm:$0x1]
    %v455 = vlaneseq
    %v456 = vshrl.u32 %v455, 7
    %v457 = vsub.s32 0, %v456
    %v458 = vrot.slane %v453, %v457
    %v476 = vunpack.c.l.b16 %v437
    %v477 = vunpack.c.l.b16 %v438
    %v478 = vunpack.c.l.b16 %v439
    %v479 = vunpack.c.l.b16 %v440
    %v480 = vunpack.c.l.b16 %v441
    %v481 = vunpack.c.l.b16 %v442
    %v482 = vunpack.c.l.b16 %v443
    %v483 = vunpack.c.l.b16 %v444
    %v484 = vunpack.c.l.b16 %v445
    %v485 = vunpack.c.l.b16 %v446
    %v486 = vunpack.c.l.b16 %v447
    %v487 = vunpack.c.l.b16 %v448
    %v488 = vunpack.c.l.b16 %v449
    %v489 = vunpack.c.l.b16 %v450
    %v490 = vunpack.c.l.b16 %v451
    %v491 = vunpack.c.l.b16 %v452
    %v492 = vpack.c.b16 %v477, %v476
    %v493 = vpack.c.b16 %v479, %v478
    %v494 = vpack.c.b16 %v481, %v480
    %v495 = vpack.c.b16 %v483, %v482
    %v496 = vpack.c.b16 %v485, %v484
    %v497 = vpack.c.b16 %v487, %v486
    %v498 = vpack.c.b16 %v489, %v488
    %v499 = vpack.c.b16 %v491, %v490
    %508 = vmatprep.subr.bf16.mxu0 0
    %509 = vmatpush1.bf16.msra.mxu0 %v492
    %510 = vmatprep.subr.bf16.mxu0 0
    %511 = vmatpush1.bf16.msra.mxu0 %v493
    %512 = vmatprep.subr.bf16.mxu0 0
    %513 = vmatpush1.bf16.msra.mxu0 %v494
    %514 = vmatprep.subr.bf16.mxu0 0
    %515 = vmatpush1.bf16.msra.mxu0 %v495
    %516 = vmatprep.subr.bf16.mxu0 0
    %517 = vmatpush1.bf16.msra.mxu0 %v496
    %518 = vmatprep.subr.bf16.mxu0 0
    %519 = vmatpush1.bf16.msra.mxu0 %v497
    %520 = vmatprep.subr.bf16.mxu0 0
    %521 = vmatpush1.bf16.msra.mxu0 %v498
    %522 = vmatprep.subr.bf16.mxu0 0
    %523 = vmatpush1.bf16.msra.mxu0 %v499
    %524 = vmatprep.subr.bf16.mxu0 0
    %525 = vmatpush1.bf16.msra.mxu0 0
    %526 = vmatprep.subr.bf16.mxu0 0
    %527 = vmatpush1.bf16.msra.mxu0 0
    %528 = vmatprep.subr.bf16.mxu0 0
    %529 = vmatpush1.bf16.msra.mxu0 0
    %530 = vmatprep.subr.bf16.mxu0 0
    %531 = vmatpush1.bf16.msra.mxu0 0
    %532 = vmatprep.subr.bf16.mxu0 0
    %533 = vmatpush1.bf16.msra.mxu0 0
    %534 = vmatprep.subr.bf16.mxu0 0
    %535 = vmatpush1.bf16.msra.mxu0 0
    %536 = vmatprep.subr.bf16.mxu0 0
    %537 = vmatpush1.bf16.msra.mxu0 0
    %538 = vmatprep.subr.bf16.mxu0 0
    %539 = vmatpush1.bf16.msra.mxu0 0
    %540 = vmatprep.mubr.bf16.mxu0 0
    %541 = vmatmul.mubr.bf16.gmra.mrb[0].mxu0 %v436
    %v542 = vpop.f32.mrb[0].mxu0
    %v543 = vadd.f32 %v458, %v542
    %v544 = vpop.f32.mrb[0].mxu0
    %v545 = vpop.f32.mrb[0].mxu0
    %v546 = vadd.f32 %v458, %v545
    %v547 = vpop.f32.mrb[0].mxu0
    %548 = vdwg.mxu0
    %549 = vst [vmem:[#allocation11] sm:$0xff] %v543
    %550 = vst [vmem:[#allocation11 + $0x8] sm:$0xff] %v546
    // Predicated region
    $region54: #{tpu_custom_call.1} parent=1 // pred_check
      _
    $region55: #{tpu_custom_call.1} parent=1 // pred_check_branch
      %552 = sbr.rel (0) target = $region57
    $region56: #{tpu_custom_call.1} parent=1 // pred_region
      %s554 = ssub.s32 256, 256
      %555 = vsyncadd [#allocation4], %s554
      %s556 = sshll.u32 [#allocation11], 4
      %s557 = int_to_ptr.vmem [resolvable:$true] %s556
      %562 = dma.vmem_to_hbm [thread:$0]  %s557, 256, %s8, [#allocation4], 128, 128, 8
    $region57: #{tpu_custom_call.1} parent=1 // pred_fallthru
      _
    // Predicated region
    $region58: #{tpu_custom_call.1} parent=1 // pred_check
      _
    $region59: #{tpu_custom_call.1} parent=1 // pred_check_branch
      %564 = sbr.rel (0) target = $region61
    $region60: #{tpu_custom_call.1} parent=1 // pred_region
      %565 = dma.done [#allocation4], 256
    $region61: #{tpu_custom_call.1} parent=1 // pred_fallthru
      _
    %566 = vsyncpa [#allocation3], 1
    %567 = vsyncpa [#allocation6], 1
    %568 = vsyncpa [#allocation9], 1
    %569 = vsyncpa [#allocation4], 1

</llo_original>
